<compile_context>
chip_gen: v7x
topology: tpu7x:2x2x1
jax: 0.10.0
libtpu: 0.0.40
codegen_flags: <defaults>
</compile_context>

<pallas_src>
import jax
import jax.numpy as jnp
from jax.experimental import pallas as pl
from jax.experimental.pallas import tpu as pltpu

# Default batch-tile size. Multiple of 8 (sublane requirement for the
# (TB, n_rules) / (TB, n_out) blocks); ~10 MiB of lane-padded, double-buffered
# VMEM, safe on all chips' default scoped limits.
_DEFAULT_BLOCK_B = 1024


def _weighted_sum_kernel(w_ref, tsk_ref, o_ref):
    # w_ref:   (TB, n_rules)          VMEM
    # tsk_ref: (TB, n_out, n_rules)   VMEM
    # o_ref:   (TB, n_out)            VMEM
    w = w_ref[...]                       # (TB, R)
    t = tsk_ref[...]                     # (TB, O, R)
    # out[b, o] = sum_r tsk[b, o, r] * w[b, r]   (VPU mul + lane reduce)
    o_ref[...] = jnp.sum(t * w[:, None, :], axis=-1).astype(o_ref.dtype)


def weighted_sum_layer(weights, tsk, *, block_b=_DEFAULT_BLOCK_B):
    """Pallas equivalent of WeightedSumLayer.forward(weights, tsk).

    weights: (B, n_rules) float32
    tsk:     (B, n_out, n_rules) float32
    returns: (B, n_out) float32
    """
    B, n_rules = weights.shape
    Bt, n_out, n_rules_t = tsk.shape
    assert B == Bt and n_rules == n_rules_t, "shape mismatch"

    # For small batches, a single tile covering the whole batch is legal
    # (block dim equal to the full array dim). For large batches, use a
    # multiple-of-8 tile; Pallas masks the partial last tile's writeback.
    if B <= block_b:
        tb = B
    else:
        tb = block_b

    grid = (pl.cdiv(B, tb),)

    return pl.pallas_call(
        _weighted_sum_kernel,
        out_shape=jax.ShapeDtypeStruct((B, n_out), tsk.dtype),
        grid_spec=pltpu.PrefetchScalarGridSpec(
            num_scalar_prefetch=0,
            grid=grid,
            in_specs=[
                pl.BlockSpec((tb, n_rules), lambda b: (b, 0)),
                pl.BlockSpec((tb, n_out, n_rules), lambda b: (b, 0, 0)),
            ],
            out_specs=pl.BlockSpec((tb, n_out), lambda b: (b, 0)),
        ),
        compiler_params=pltpu.CompilerParams(
            # Batch tiles are independent -> shard across TCs on v7x.
            dimension_semantics=("parallel",),
        ),
    )(weights, tsk)


if __name__ == "__main__":
    # Small shapes consistent with ANFIS usage:
    #   batch=2, n_out=8 (TSK consequent outputs), n_rules=32 (fuzzy rules).
    # TODO(synk): at these tiny sizes a plain jnp.einsum (or fusing into the
    # tsk producer) beats any standalone kernel; the Pallas path pays off only
    # for large batches.
    B, n_out, n_rules = 2, 8, 32

    key = jax.random.PRNGKey(0)
    k_w, k_t = jax.random.split(key)
    weights = jax.random.uniform(k_w, (B, n_rules), dtype=jnp.float32)
    tsk = jax.random.normal(k_t, (B, n_out, n_rules), dtype=jnp.float32)

    out = weighted_sum_layer(weights, tsk)
    out = jax.block_until_ready(out)

    # Reference check (plain JAX bmm): (B, n_out, n_rules) @ (B, n_rules, 1)
    ref = jnp.squeeze(jnp.matmul(tsk, weights[:, :, None]), axis=2)
    assert out.shape == (B, n_out)
    assert jnp.allclose(out, ref, atol=1e-5, rtol=1e-5), "mismatch vs reference"

    print("KERNEL_OK")
</pallas_src>

<mosaic_0001>
module attributes {stable_mosaic.version = 11 : i64} {
  func.func @_weighted_sum_kernel(%arg0: i32, %arg1: memref<2x32xf32, #tpu.memory_space<vmem>>, %arg2: memref<2x8x32xf32, #tpu.memory_space<vmem>>, %arg3: memref<2x8xf32, #tpu.memory_space<vmem>>) attributes {dimension_semantics = [#tpu.dimension_semantics<parallel>], iteration_bounds = array<i64: 1>, scalar_prefetch = 0 : i64, scratch_operands = 0 : i64, tpu.core_type = #tpu.core_type<tc>, window_params = [{transform_indices = @transform_0, window_bounds = array<i64: 2, 32>}, {transform_indices = @transform_1, window_bounds = array<i64: 2, 8, 32>}, {transform_indices = @transform_2, window_bounds = array<i64: 2, 8>}]} {
    %c0 = arith.constant 0 : index
    %c0_0 = arith.constant 0 : index
    %0 = vector.load %arg1[%c0, %c0_0] : memref<2x32xf32, #tpu.memory_space<vmem>>, vector<2x32xf32>
    %c0_1 = arith.constant 0 : index
    %c0_2 = arith.constant 0 : index
    %c0_3 = arith.constant 0 : index
    %1 = vector.load %arg2[%c0_1, %c0_2, %c0_3] : memref<2x8x32xf32, #tpu.memory_space<vmem>>, vector<2x8x32xf32>
    %2 = vector.shape_cast %0 : vector<2x32xf32> to vector<2x1x32xf32>
    %3 = vector.broadcast %2 : vector<2x1x32xf32> to vector<2x8x32xf32>
    %4 = arith.mulf %1, %3 : vector<2x8x32xf32>
    %cst = arith.constant dense<0.000000e+00> : vector<2x8xf32>
    %5 = vector.multi_reduction <add>, %4, %cst [2] : vector<2x8x32xf32> to vector<2x8xf32>
    %c0_4 = arith.constant 0 : index
    %c0_5 = arith.constant 0 : index
    %6 = vector.load %arg3[%c0_4, %c0_5] : memref<2x8xf32, #tpu.memory_space<vmem>>, vector<2x8xf32>
    tpu.vector_store %arg3[%c0_4, %c0_5], %5 {strides = array<i32>} : memref<2x8xf32, #tpu.memory_space<vmem>>, vector<2x8xf32>,
    return
  }
  func.func @transform_0(%arg0: i32) -> (i32, i32) {
    %c0_i32 = arith.constant 0 : i32
    %c0_i32_0 = arith.constant 0 : i32
    return %arg0, %c0_i32 : i32, i32
  }
  func.func @transform_1(%arg0: i32) -> (i32, i32, i32) {
    %c0_i32 = arith.constant 0 : i32
    %c0_i32_0 = arith.constant 0 : i32
    %c0_i32_1 = arith.constant 0 : i32
    return %arg0, %c0_i32, %c0_i32_0 : i32, i32, i32
  }
  func.func @transform_2(%arg0: i32) -> (i32, i32) {
    %c0_i32 = arith.constant 0 : i32
    %c0_i32_0 = arith.constant 0 : i32
    return %arg0, %c0_i32 : i32, i32
  }
}

</mosaic_0001>

<llo_original>
// kernel: tpu_custom_call.1
$region0: #{tpu_custom_call.1}
  #allocation0 [shape = 'u32[]', space=smem, size = 0x4, offset = 0x4, fixed_abs, tag = 'smem constant byte address 0x4 - core index']
  #allocation1 [shape = 'u32[144,128]{1,0:T(1,128)}', space=vmem, size = 0x12000, scoped, tag = 'internal scratch']
  %s0 = inlined_call_operand.hbm [shape: f32[2,32], index: 0, kind: input, shape index: {}]
  %s1 = inlined_call_operand.hbm [shape: f32[2,8,32], index: 1, kind: input, shape index: {}]
  %s2 = inlined_call_operand.hbm [shape: f32[2,8], index: 2, kind: output, shape index: {}]
  %s3 = sld [smem:[#allocation0]]
  $region26: #{tpu_custom_call.1} parent=0
    _
  %s5 = ssub.s32 1, %s3
  %s6 = scalar_select 0, %s5, %s3
  $region1: #{tpu_custom_call.1} parent=0
    #allocation2 [shape = 'u8[1024]{0}', space=vmem, size = 0x400, scoped, tag = 'input window, operand 0, single buffered']
    #allocation3 [shape = 's32[1]{0}', space=sflag, size = 0x4, scoped, tag = 'scoped memory for tpu_custom_call.1']
    #allocation4 [shape = 's32[1]{0}', space=sflag, size = 0x4, scoped, tag = 'scoped memory for tpu_custom_call.1']
    #allocation5 [shape = 'u8[8192]{0}', space=vmem, size = 0x2000, scoped, tag = 'input window, operand 1, single buffered']
    #allocation6 [shape = 's32[1]{0}', space=sflag, size = 0x4, scoped, tag = 'scoped memory for tpu_custom_call.1']
    #allocation7 [shape = 'u8[1024]{0}', space=vmem, size = 0x400, scoped, tag = 'output window, operand 0, single buffered']
    %7 = vsyncpa [#allocation3], 0
    %8 = vsyncpa [#allocation6], 0
    %9 = vsyncpa [#allocation4], 0
    // Predicated region
    $region2: #{tpu_custom_call.1} parent=1 // pred_check
      _
    $region3: #{tpu_custom_call.1} parent=1 // pred_check_branch
      %11 = sbr.rel (0) target = $region5
    $region4: #{tpu_custom_call.1} parent=1 // pred_region
      %s13 = ssub.s32 32, 32
      %14 = vsyncadd [#allocation3], %s13
      %s16 = sshll.u32 [#allocation2], 4
      %s17 = int_to_ptr.vmem [resolvable:$true] %s16
      %19 = dma.hbm_to_vmem [thread:$0]  %s0, 32, %s17, [#allocation3]
    $region5: #{tpu_custom_call.1} parent=1 // pred_fallthru
      _
    // Predicated region
    $region6: #{tpu_custom_call.1} parent=1 // pred_check
      _
    $region7: #{tpu_custom_call.1} parent=1 // pred_check_branch
      %21 = sbr.rel (0) target = $region9
    $region8: #{tpu_custom_call.1} parent=1 // pred_region
      %s23 = ssub.s32 256, 256
      %24 = vsyncadd [#allocation6], %s23
      %s25 = sshll.u32 [#allocation5], 4
      %s26 = int_to_ptr.vmem [resolvable:$true] %s25
      %31 = dma.hbm_to_vmem [thread:$0]  %s1, 256, %s26, [#allocation6], 128, 128, 8
    $region9: #{tpu_custom_call.1} parent=1 // pred_fallthru
      _
    // Predicated region
    $region10: #{tpu_custom_call.1} parent=1 // pred_check
      _
    $region11: #{tpu_custom_call.1} parent=1 // pred_check_branch
      %33 = sbr.rel (0) target = $region13
    $region12: #{tpu_custom_call.1} parent=1 // pred_region
      %34 = dma.done [#allocation3], 32
    $region13: #{tpu_custom_call.1} parent=1 // pred_fallthru
      _
    // Predicated region
    $region14: #{tpu_custom_call.1} parent=1 // pred_check
      _
    $region15: #{tpu_custom_call.1} parent=1 // pred_check_branch
      %36 = sbr.rel (0) target = $region17
    $region16: #{tpu_custom_call.1} parent=1 // pred_region
      %37 = dma.done [#allocation6], 256
    $region17: #{tpu_custom_call.1} parent=1 // pred_fallthru
      _
    %v38 = vld [vmem:[#allocation2] sm:$0x3]
    %v39 = vld [vmem:[#allocation5] sm:$0xff]
    %v40 = vld [vmem:[#allocation5 + $0x8] sm:$0xff]
    %v43 = vunpack.c.l.s4 1966171168
    %v44 = vunpack.c.0.s8 %v43
    %v45 = vlaneseq
    %v46 = vshrl.u32 %v45, 7
    %v47 = vsub.s32 %v44, %v46
    %v48 = vrot.slane %v38, %v47
    %v49 = vcombine.high %v48, %v48
    %v51 = vunpack.c.l.s4 1966171168
    %v52 = vunpack.c.0.s8 %v51
    %v53 = vlaneseq
    %v54 = vshrl.u32 %v53, 7
    %v55 = vsub.s32 %v52, %v54
    %v56 = vrot.slane %v48, %v55
    %v58 = vunpack.c.l.s4 1966171168
    %v59 = vunpack.c.0.s8 %v58
    %v60 = vlaneseq
    %v61 = vshrl.u32 %v60, 7
    %v62 = vsub.s32 %v59, %v61
    %v63 = vrot.slane %v49, %v62
    %v64 = vlaneseq
    %v65 = vshrl.u32 %v64, 7
    %v66 = vsub.s32 0, %v65
    %v67 = vrot.slane %v56, %v66
    %v68 = vlaneseq
    %v69 = vshrl.u32 %v68, 7
    %v70 = vsub.s32 0, %v69
    %v71 = vrot.slane %v63, %v70
    %v74 = vmul.f32 %v39, %v67
    %v75 = vmul.f32 %v40, %v71
    %vm76 = vcmask 261120
    %v77 = vsel %vm76, %v74, 0.0
    %78 = vadd.xlane.f32.xlu0 %v77
    %v79 = vpop.xlane.xlu0 %78
    %v80 = vsel %vm76, %v75, 0.0
    %81 = vadd.xlane.f32.xlu0 %v80
    %v82 = vpop.xlane.xlu0 %81
    %v85 = vlaneseq
    %v86 = vand.u32 %v85, 127
    %v87 = vlaneseq
    %v88 = vshrl.u32 %v87, 7
    %v89 = vsub.s32 %v86, %v88
    %v90 = vrot.slane %v79, %v89
    %v91 = vlaneseq
    %v92 = vshrl.u32 %v91, 7
    %v93 = vsub.s32 %v86, %v92
    %v94 = vrot.slane %v82, %v93
    %vm95 = vcmask 1041409
    %v96 = vsel %vm95, %v94, %v90
    %vm98 = vcmask 58368
    %99 = vst.msk [vmem:[#allocation7] sm:$0x3] %vm98, %v96
    // Predicated region
    $region18: #{tpu_custom_call.1} parent=1 // pred_check
      _
    $region19: #{tpu_custom_call.1} parent=1 // pred_check_branch
      %101 = sbr.rel (0) target = $region21
    $region20: #{tpu_custom_call.1} parent=1 // pred_region
      %s103 = ssub.s32 32, 32
      %104 = vsyncadd [#allocation4], %s103
      %s106 = sshll.u32 [#allocation7], 4
      %s107 = int_to_ptr.vmem [resolvable:$true] %s106
      %109 = dma.vmem_to_hbm [thread:$0]  %s107, 32, %s2, [#allocation4]
    $region21: #{tpu_custom_call.1} parent=1 // pred_fallthru
      _
    // Predicated region
    $region22: #{tpu_custom_call.1} parent=1 // pred_check
      _
    $region23: #{tpu_custom_call.1} parent=1 // pred_check_branch
      %111 = sbr.rel (0) target = $region25
    $region24: #{tpu_custom_call.1} parent=1 // pred_region
      %112 = dma.done [#allocation4], 32
    $region25: #{tpu_custom_call.1} parent=1 // pred_fallthru
      _
    %113 = vsyncpa [#allocation3], 1
    %114 = vsyncpa [#allocation6], 1
    %115 = vsyncpa [#allocation4], 1

</llo_original>
